<compile_context>
chip_gen: v7x
topology: tpu7x:2x2x1
jax: 0.10.0
libtpu: 0.0.40
codegen_flags: <defaults>
</compile_context>

<pallas_src>
import functools

import jax
import jax.numpy as jnp
from jax.experimental import pallas as pl
from jax.experimental.pallas import tpu as pltpu


def temporal_block_kernel(x_ref, w1r_ref, b1r_ref, w2_ref, b2_ref, mask_ref,
                          out_ref, xt, y1e, yt,
                          *, W, K, dil, pad, pad_a, c_in_p, c_out_p):
    xv = x_ref[0]                                   # (c_in_p, pad_a + W), bf16

    # ---- conv1 + 1x1 residual: stage K causally shifted taps, one fused -----
    # ---- MXU contraction whose extra output rows are the downsample ---------
    for k in range(K):                              # K is small & static
        off = pad_a - pad + k * dil
        xt[k * c_in_p:(k + 1) * c_in_p, :] = xv[:, off:off + W]
    acc = jnp.dot(w1r_ref[...], xt[...],
                  preferred_element_type=jnp.float32) + b1r_ref[...]
    y1 = jnp.maximum(acc[:c_out_p], 0.0)            # conv1 bias + ReLU (f32)
    res = acc[c_out_p:]                             # downsample(x) + db (f32)
    # dropout1: identity (eval mode)

    # Zero only the aligned lead (not the full slab) and mask the per-segment
    # pad/tail columns so conv2 stays causal; the store at column pad_a is a
    # lane-aligned, unmasked bf16 store.
    if pad_a:
        y1e[:, :pad_a] = jnp.zeros((c_out_p, pad_a), jnp.bfloat16)
    y1e[:, pad_a:] = (y1 * mask_ref[...]).astype(jnp.bfloat16)

    # ---- conv2: same fused-tap contraction over the causal y1 buffer --------
    for k in range(K):
        off = pad_a - pad + k * dil
        yt[k * c_out_p:(k + 1) * c_out_p, :] = y1e[:, off:off + W]
    y2 = jnp.maximum(
        jnp.dot(w2_ref[...], yt[...], preferred_element_type=jnp.float32)
        + b2_ref[...], 0.0)
    # dropout2: identity (eval mode)

    # ---- residual add + final ReLU -------------------------------------------
    out_ref[0] = jnp.maximum(y2 + res, 0.0)


def _round_up(v, m):
    return (v + m - 1) // m * m


def temporal_block(x, w1, b1, w2, b2, dw=None, db=None, *, dilation,
                   vmem_budget_bytes=8 << 20):
    """TemporalBlock forward (eval mode, stride=1).

    x: (N, C_in, L) f32; w1: (C_out, C_in, K); w2: (C_out, C_out, K);
    dw: (C_out, C_in) 1x1 downsample or None (identity when C_in == C_out);
    biases b1/b2/db: (C_out,).
    """
    N, c_in, L = x.shape
    c_out, _, K = w1.shape
    dil = int(dilation)
    pad = dil * (K - 1)

    if dw is None:                       # identity residual (C_in == C_out)
        dw = jnp.eye(c_out, c_in, dtype=jnp.float32)
    if db is None:
        db = jnp.zeros((c_out,), jnp.float32)

    # sublane multiple of 16 (packed bf16 rows), lane multiples of 128
    c_in_p = _round_up(c_in, 16)
    c_out_p = _round_up(c_out, 16)
    L_p = _round_up(L, 128)
    pad_a = _round_up(pad, 128) if pad > 0 else 0
    P = pad_a + L_p                      # lane-aligned per-batch segment width

    # segments (batch elements) per grid step, bounded by a rough VMEM budget
    bytes_per_col = (4 * c_in_p + 8 * c_out_p + 2 * K * (c_in_p + c_out_p)
                     + 2 * c_out_p + 20 * c_out_p)
    w_target = max(P, (vmem_budget_bytes // bytes_per_col) // 128 * 128)
    SB = max(1, min(N, w_target // P))   # segments per grid step
    NB = -(-N // SB)                     # grid steps
    N_pad = NB * SB
    W = SB * P                           # output columns per grid step
    # TODO(synk): for a single very long sequence (small N, huge L) also tile
    # the L axis with a causal halo instead of relying on batch tiling alone.

    f32, bf16 = jnp.float32, jnp.bfloat16

    # ---- wrapper-side layout glue (plain XLA, done once in HBM) -------------
    # per-batch segment: [pad_a zeros | x_n | zeros to L_p], concatenated along
    # lanes; each block of SB segments additionally gets a pad_a zero lead so
    # every in-kernel tap slice has a non-negative start.
    xp = jnp.zeros((N_pad, c_in_p, P), f32).at[:N, :c_in, pad_a:pad_a + L].set(x)
    xb = xp.reshape(NB, SB, c_in_p, P).transpose(0, 2, 1, 3).reshape(NB, c_in_p, W)
    xb = jnp.pad(xb, ((0, 0), (0, 0), (pad_a, 0))).astype(bf16)

    # combined conv1 + downsample weights: rows [0, c_out_p) hold the K conv1
    # taps; rows [c_out_p, 2*c_out_p) hold dw in the output-aligned (last) tap.
    w1r = jnp.zeros((2 * c_out_p, K, c_in_p), f32)
    w1r = w1r.at[:c_out, :, :c_in].set(jnp.transpose(w1, (0, 2, 1)))
    w1r = w1r.at[c_out_p:c_out_p + c_out, K - 1, :c_in].set(dw)
    w1r = w1r.reshape(2 * c_out_p, K * c_in_p).astype(bf16)
    b1r = jnp.zeros((2 * c_out_p, 1), f32)
    b1r = b1r.at[:c_out, 0].set(b1).at[c_out_p:c_out_p + c_out, 0].set(db)

    w2c = jnp.zeros((c_out_p, K, c_out_p), f32)
    w2c = w2c.at[:c_out, :, :c_out].set(jnp.transpose(w2, (0, 2, 1)))
    w2c = w2c.reshape(c_out_p, K * c_out_p).astype(bf16)
    b2c = jnp.zeros((c_out_p, 1), f32).at[:c_out, 0].set(b2)

    # 1 on valid data columns of each segment, 0 on pad/tail columns
    col = jnp.arange(W, dtype=jnp.int32) % P
    mask = ((col >= pad_a) & (col < pad_a + L)).astype(f32).reshape(1, W)

    kernel = functools.partial(temporal_block_kernel, W=W, K=K, dil=dil,
                               pad=pad, pad_a=pad_a, c_in_p=c_in_p,
                               c_out_p=c_out_p)
    out = pl.pallas_call(
        kernel,
        out_shape=jax.ShapeDtypeStruct((NB, c_out_p, W), f32),
        grid=(NB,),
        in_specs=[
            pl.BlockSpec((1, c_in_p, pad_a + W), lambda b: (b, 0, 0)),
            pl.BlockSpec((2 * c_out_p, K * c_in_p), lambda b: (0, 0)),
            pl.BlockSpec((2 * c_out_p, 1), lambda b: (0, 0)),
            pl.BlockSpec((c_out_p, K * c_out_p), lambda b: (0, 0)),
            pl.BlockSpec((c_out_p, 1), lambda b: (0, 0)),
            pl.BlockSpec((1, W), lambda b: (0, 0)),
        ],
        out_specs=pl.BlockSpec((1, c_out_p, W), lambda b: (b, 0, 0)),
        scratch_shapes=[
            pltpu.VMEM((K * c_in_p, W), bf16),        # staged conv1 taps
            pltpu.VMEM((c_out_p, pad_a + W), bf16),   # causal y1 buffer
            pltpu.VMEM((K * c_out_p, W), bf16),       # staged conv2 taps
        ],
        compiler_params=pltpu.CompilerParams(
            dimension_semantics=("parallel",)),
    )(xb, w1r, b1r, w2c, b2c, mask)

    # un-concatenate segments and strip padding
    out = out.reshape(NB, c_out_p, SB, P).transpose(0, 2, 1, 3)
    out = out.reshape(N_pad, c_out_p, P)[:N, :c_out, pad_a:pad_a + L]
    return out


# ---------------------------- pure-JAX reference -----------------------------
def _conv1d_causal_ref(x, w, b, dilation):
    K = w.shape[-1]
    pad = dilation * (K - 1)
    y = jax.lax.conv_general_dilated(
        x, w, window_strides=(1,), padding=[(pad, pad)],
        rhs_dilation=(dilation,), dimension_numbers=("NCH", "OIH", "NCH"))
    y = y[:, :, : x.shape[-1]]                          # Chomp1d(pad)
    return y + b[None, :, None]


def temporal_block_ref(x, w1, b1, w2, b2, dw, db, *, dilation):
    h = jnp.maximum(_conv1d_causal_ref(x, w1, b1, dilation), 0.0)
    h = jnp.maximum(_conv1d_causal_ref(h, w2, b2, dilation), 0.0)
    res = jnp.einsum("oc,ncl->nol", dw, x) + db[None, :, None]
    return jnp.maximum(h + res, 0.0)


def _weight_norm(v, g):
    # PyTorch weight_norm, dim=0: w = g * v / ||v|| (norm over all dims but 0)
    norm = jnp.sqrt(jnp.sum(v * v, axis=(1, 2), keepdims=True))
    return g.reshape(-1, 1, 1) * v / norm


if __name__ == "__main__":
    key = jax.random.PRNGKey(0)
    N, C_IN, C_OUT, L = 2, 4, 8, 16
    K, DIL = 3, 2            # padding = (K-1)*dilation = 4, stride = 1

    ks = jax.random.split(key, 8)
    # weight_norm parametrization: v (direction) and g (magnitude)
    v1 = 0.01 * jax.random.normal(ks[0], (C_OUT, C_IN, K), jnp.float32)
    g1 = 1.0 + 0.1 * jax.random.normal(ks[1], (C_OUT,), jnp.float32)
    v2 = 0.01 * jax.random.normal(ks[2], (C_OUT, C_OUT, K), jnp.float32)
    g2 = 1.0 + 0.1 * jax.random.normal(ks[3], (C_OUT,), jnp.float32)
    w1 = _weight_norm(v1, g1)
    w2 = _weight_norm(v2, g2)
    b1 = 0.05 * jax.random.normal(ks[4], (C_OUT,), jnp.float32)
    b2 = 0.05 * jax.random.normal(ks[5], (C_OUT,), jnp.float32)
    dw = 0.01 * jax.random.normal(ks[6], (C_OUT, C_IN), jnp.float32)
    db = 0.05 * jax.random.normal(ks[7], (C_OUT,), jnp.float32)

    x = jax.random.normal(key, (N, C_IN, L), jnp.float32)

    fwd = jax.jit(functools.partial(temporal_block, dilation=DIL))
    out = fwd(x, w1, b1, w2, b2, dw, db)
    out = jax.block_until_ready(out)

    ref = temporal_block_ref(x, w1, b1, w2, b2, dw, db, dilation=DIL)
    assert out.shape == (N, C_OUT, L)
    # bf16 matmul operands (f32 accumulation) vs an all-f32 reference
    assert jnp.allclose(out, ref, atol=3e-2, rtol=3e-2), (
        float(jnp.max(jnp.abs(out - ref))))

    print("KERNEL_OK")
</pallas_src>

<mosaic_0001>
module attributes {stable_mosaic.version = 11 : i64} {
  func.func @temporal_block_kernel(%arg0: i32, %arg1: memref<1x16x640xbf16, #tpu.memory_space<vmem>>, %arg2: memref<32x48xbf16, #tpu.memory_space<vmem>>, %arg3: memref<32x1xf32, #tpu.memory_space<vmem>>, %arg4: memref<16x48xbf16, #tpu.memory_space<vmem>>, %arg5: memref<16x1xf32, #tpu.memory_space<vmem>>, %arg6: memref<1x512xf32, #tpu.memory_space<vmem>>, %arg7: memref<1x16x512xf32, #tpu.memory_space<vmem>>, %arg8: memref<48x512xbf16, #tpu.memory_space<vmem>>, %arg9: memref<16x640xbf16, #tpu.memory_space<vmem>>, %arg10: memref<48x512xbf16, #tpu.memory_space<vmem>>) attributes {dimension_semantics = [#tpu.dimension_semantics<parallel>], iteration_bounds = array<i64: 1>, scalar_prefetch = 0 : i64, scratch_operands = 3 : i64, tpu.core_type = #tpu.core_type<tc>, window_params = [{transform_indices = @transform_0, window_bounds = array<i64: 1, 16, 640>}, {pipeline_mode = #tpu.pipeline_mode<synchronous>, transform_indices = @transform_1, window_bounds = array<i64: 32, 48>}, {pipeline_mode = #tpu.pipeline_mode<synchronous>, transform_indices = @transform_2, window_bounds = array<i64: 32, 1>}, {pipeline_mode = #tpu.pipeline_mode<synchronous>, transform_indices = @transform_3, window_bounds = array<i64: 16, 48>}, {pipeline_mode = #tpu.pipeline_mode<synchronous>, transform_indices = @transform_4, window_bounds = array<i64: 16, 1>}, {pipeline_mode = #tpu.pipeline_mode<synchronous>, transform_indices = @transform_5, window_bounds = array<i64: 1, 512>}, {transform_indices = @transform_6, window_bounds = array<i64: 1, 16, 512>}]} {
    %c0 = arith.constant 0 : index
    %c0_0 = arith.constant 0 : index
    %c0_1 = arith.constant 0 : index
    %0 = vector.load %arg1[%c0, %c0_0, %c0_1] : memref<1x16x640xbf16, #tpu.memory_space<vmem>>, vector<1x16x640xbf16>
    %1 = vector.shape_cast %0 : vector<1x16x640xbf16> to vector<16x640xbf16>
    %2 = vector.extract_strided_slice %1 {offsets = [0, 124], sizes = [16, 512], strides = [1, 1]} : vector<16x640xbf16> to vector<16x512xbf16>
    %c0_2 = arith.constant 0 : index
    %c0_3 = arith.constant 0 : index
    %3 = vector.load %arg8[%c0_2, %c0_3] : memref<48x512xbf16, #tpu.memory_space<vmem>>, vector<16x512xbf16>
    tpu.vector_store %arg8[%c0_2, %c0_3], %2 {strides = array<i32>} : memref<48x512xbf16, #tpu.memory_space<vmem>>, vector<16x512xbf16>,
    %4 = vector.extract_strided_slice %1 {offsets = [0, 126], sizes = [16, 512], strides = [1, 1]} : vector<16x640xbf16> to vector<16x512xbf16>
    %c16 = arith.constant 16 : index
    %c0_4 = arith.constant 0 : index
    %5 = vector.load %arg8[%c16, %c0_4] : memref<48x512xbf16, #tpu.memory_space<vmem>>, vector<16x512xbf16>
    tpu.vector_store %arg8[%c16, %c0_4], %4 {strides = array<i32>} : memref<48x512xbf16, #tpu.memory_space<vmem>>, vector<16x512xbf16>,
    %6 = vector.extract_strided_slice %1 {offsets = [0, 128], sizes = [16, 512], strides = [1, 1]} : vector<16x640xbf16> to vector<16x512xbf16>
    %c32 = arith.constant 32 : index
    %c0_5 = arith.constant 0 : index
    %7 = vector.load %arg8[%c32, %c0_5] : memref<48x512xbf16, #tpu.memory_space<vmem>>, vector<16x512xbf16>
    tpu.vector_store %arg8[%c32, %c0_5], %6 {strides = array<i32>} : memref<48x512xbf16, #tpu.memory_space<vmem>>, vector<16x512xbf16>,
    %c0_6 = arith.constant 0 : index
    %c0_7 = arith.constant 0 : index
    %8 = vector.load %arg2[%c0_6, %c0_7] : memref<32x48xbf16, #tpu.memory_space<vmem>>, vector<32x48xbf16>
    %c0_8 = arith.constant 0 : index
    %c0_9 = arith.constant 0 : index
    %9 = vector.load %arg8[%c0_8, %c0_9] : memref<48x512xbf16, #tpu.memory_space<vmem>>, vector<48x512xbf16>
    %cst = arith.constant dense<0.000000e+00> : vector<32x512xf32>
    %10 = tpu.matmul %8, %9, %cst {dimension_numbers = #tpu.dot_dimension_numbers<[1], [0], [0], [1], [0, 0, 1, 1], [], []>} : vector<32x48xbf16>, vector<48x512xbf16>, vector<32x512xf32> -> vector<32x512xf32>
    %c0_10 = arith.constant 0 : index
    %c0_11 = arith.constant 0 : index
    %11 = vector.load %arg3[%c0_10, %c0_11] : memref<32x1xf32, #tpu.memory_space<vmem>>, vector<32x1xf32>
    %12 = vector.broadcast %11 : vector<32x1xf32> to vector<32x512xf32>
    %13 = arith.addf %10, %12 : vector<32x512xf32>
    %14 = vector.extract_strided_slice %13 {offsets = [0, 0], sizes = [16, 512], strides = [1, 1]} : vector<32x512xf32> to vector<16x512xf32>
    %cst_12 = arith.constant 0.000000e+00 : f32
    %15 = vector.broadcast %cst_12 : f32 to vector<16x512xf32>
    %16 = arith.maximumf %14, %15 : vector<16x512xf32>
    %17 = vector.extract_strided_slice %13 {offsets = [16, 0], sizes = [16, 512], strides = [1, 1]} : vector<32x512xf32> to vector<16x512xf32>
    %cst_13 = arith.constant 0.000000e+00 : bf16
    %18 = vector.broadcast %cst_13 : bf16 to vector<16x128xbf16>
    %c0_14 = arith.constant 0 : index
    %c0_15 = arith.constant 0 : index
    %19 = vector.load %arg9[%c0_14, %c0_15] : memref<16x640xbf16, #tpu.memory_space<vmem>>, vector<16x128xbf16>
    tpu.vector_store %arg9[%c0_14, %c0_15], %18 {strides = array<i32>} : memref<16x640xbf16, #tpu.memory_space<vmem>>, vector<16x128xbf16>,
    %c0_16 = arith.constant 0 : index
    %c0_17 = arith.constant 0 : index
    %20 = vector.load %arg6[%c0_16, %c0_17] : memref<1x512xf32, #tpu.memory_space<vmem>>, vector<1x512xf32>
    %21 = vector.broadcast %20 : vector<1x512xf32> to vector<16x512xf32>
    %22 = arith.mulf %16, %21 : vector<16x512xf32>
    %23 = arith.truncf %22 : vector<16x512xf32> to vector<16x512xbf16>
    %c0_18 = arith.constant 0 : index
    %c128 = arith.constant 128 : index
    %24 = vector.load %arg9[%c0_18, %c128] : memref<16x640xbf16, #tpu.memory_space<vmem>>, vector<16x512xbf16>
    tpu.vector_store %arg9[%c0_18, %c128], %23 {strides = array<i32>} : memref<16x640xbf16, #tpu.memory_space<vmem>>, vector<16x512xbf16>,
    %c0_19 = arith.constant 0 : index
    %c124 = arith.constant 124 : index
    %25 = vector.load %arg9[%c0_19, %c124] : memref<16x640xbf16, #tpu.memory_space<vmem>>, vector<16x512xbf16>
    %c0_20 = arith.constant 0 : index
    %c0_21 = arith.constant 0 : index
    %26 = vector.load %arg10[%c0_20, %c0_21] : memref<48x512xbf16, #tpu.memory_space<vmem>>, vector<16x512xbf16>
    tpu.vector_store %arg10[%c0_20, %c0_21], %25 {strides = array<i32>} : memref<48x512xbf16, #tpu.memory_space<vmem>>, vector<16x512xbf16>,
    %c0_22 = arith.constant 0 : index
    %c126 = arith.constant 126 : index
    %27 = vector.load %arg9[%c0_22, %c126] : memref<16x640xbf16, #tpu.memory_space<vmem>>, vector<16x512xbf16>
    %c16_23 = arith.constant 16 : index
    %c0_24 = arith.constant 0 : index
    %28 = vector.load %arg10[%c16_23, %c0_24] : memref<48x512xbf16, #tpu.memory_space<vmem>>, vector<16x512xbf16>
    tpu.vector_store %arg10[%c16_23, %c0_24], %27 {strides = array<i32>} : memref<48x512xbf16, #tpu.memory_space<vmem>>, vector<16x512xbf16>,
    %c0_25 = arith.constant 0 : index
    %c128_26 = arith.constant 128 : index
    %29 = vector.load %arg9[%c0_25, %c128_26] : memref<16x640xbf16, #tpu.memory_space<vmem>>, vector<16x512xbf16>
    %c32_27 = arith.constant 32 : index
    %c0_28 = arith.constant 0 : index
    %30 = vector.load %arg10[%c32_27, %c0_28] : memref<48x512xbf16, #tpu.memory_space<vmem>>, vector<16x512xbf16>
    tpu.vector_store %arg10[%c32_27, %c0_28], %29 {strides = array<i32>} : memref<48x512xbf16, #tpu.memory_space<vmem>>, vector<16x512xbf16>,
    %c0_29 = arith.constant 0 : index
    %c0_30 = arith.constant 0 : index
    %31 = vector.load %arg4[%c0_29, %c0_30] : memref<16x48xbf16, #tpu.memory_space<vmem>>, vector<16x48xbf16>
    %c0_31 = arith.constant 0 : index
    %c0_32 = arith.constant 0 : index
    %32 = vector.load %arg10[%c0_31, %c0_32] : memref<48x512xbf16, #tpu.memory_space<vmem>>, vector<48x512xbf16>
    %cst_33 = arith.constant dense<0.000000e+00> : vector<16x512xf32>
    %33 = tpu.matmul %31, %32, %cst_33 {dimension_numbers = #tpu.dot_dimension_numbers<[1], [0], [0], [1], [0, 0, 1, 1], [], []>} : vector<16x48xbf16>, vector<48x512xbf16>, vector<16x512xf32> -> vector<16x512xf32>
    %c0_34 = arith.constant 0 : index
    %c0_35 = arith.constant 0 : index
    %34 = vector.load %arg5[%c0_34, %c0_35] : memref<16x1xf32, #tpu.memory_space<vmem>>, vector<16x1xf32>
    %35 = vector.broadcast %34 : vector<16x1xf32> to vector<16x512xf32>
    %36 = arith.addf %33, %35 : vector<16x512xf32>
    %cst_36 = arith.constant 0.000000e+00 : f32
    %37 = vector.broadcast %cst_36 : f32 to vector<16x512xf32>
    %38 = arith.maximumf %36, %37 : vector<16x512xf32>
    %39 = arith.addf %38, %17 : vector<16x512xf32>
    %cst_37 = arith.constant 0.000000e+00 : f32
    %40 = vector.broadcast %cst_37 : f32 to vector<16x512xf32>
    %41 = arith.maximumf %39, %40 : vector<16x512xf32>
    %c0_38 = arith.constant 0 : index
    %c0_39 = arith.constant 0 : index
    %c0_40 = arith.constant 0 : index
    %42 = vector.load %arg7[%c0_38, %c0_39, %c0_40] : memref<1x16x512xf32, #tpu.memory_space<vmem>>, vector<1x16x512xf32>
    %43 = vector.shape_cast %42 : vector<1x16x512xf32> to vector<16x512xf32>
    %44 = vector.shape_cast %41 : vector<16x512xf32> to vector<1x16x512xf32>
    tpu.vector_store %arg7[%c0_38, %c0_39, %c0_40], %44 {strides = array<i32>} : memref<1x16x512xf32, #tpu.memory_space<vmem>>, vector<1x16x512xf32>,
    return
  }
  func.func @transform_0(%arg0: i32) -> (i32, i32, i32) {
    %c0_i32 = arith.constant 0 : i32
    %c0_i32_0 = arith.constant 0 : i32
    %c0_i32_1 = arith.constant 0 : i32
    return %arg0, %c0_i32, %c0_i32_0 : i32, i32, i32
  }
  func.func @transform_1(%arg0: i32) -> (i32, i32) {
    %c0_i32 = arith.constant 0 : i32
    %c0_i32_0 = arith.constant 0 : i32
    %c0_i32_1 = arith.constant 0 : i32
    return %c0_i32, %c0_i32_0 : i32, i32
  }
  func.func @transform_2(%arg0: i32) -> (i32, i32) {
    %c0_i32 = arith.constant 0 : i32
    %c0_i32_0 = arith.constant 0 : i32
    %c0_i32_1 = arith.constant 0 : i32
    return %c0_i32, %c0_i32_0 : i32, i32
  }
  func.func @transform_3(%arg0: i32) -> (i32, i32) {
    %c0_i32 = arith.constant 0 : i32
    %c0_i32_0 = arith.constant 0 : i32
    %c0_i32_1 = arith.constant 0 : i32
    return %c0_i32, %c0_i32_0 : i32, i32
  }
  func.func @transform_4(%arg0: i32) -> (i32, i32) {
    %c0_i32 = arith.constant 0 : i32
    %c0_i32_0 = arith.constant 0 : i32
    %c0_i32_1 = arith.constant 0 : i32
    return %c0_i32, %c0_i32_0 : i32, i32
  }
  func.func @transform_5(%arg0: i32) -> (i32, i32) {
    %c0_i32 = arith.constant 0 : i32
    %c0_i32_0 = arith.constant 0 : i32
    %c0_i32_1 = arith.constant 0 : i32
    return %c0_i32, %c0_i32_0 : i32, i32
  }
  func.func @transform_6(%arg0: i32) -> (i32, i32, i32) {
    %c0_i32 = arith.constant 0 : i32
    %c0_i32_0 = arith.constant 0 : i32
    %c0_i32_1 = arith.constant 0 : i32
    return %arg0, %c0_i32, %c0_i32_0 : i32, i32, i32
  }
}

</mosaic_0001>

<llo_original>
// kernel: temporal_block.1
$region0: #{temporal_block.1}
  #allocation0 [shape = 'u32[]', space=smem, size = 0x4, offset = 0x4, fixed_abs, tag = 'smem constant byte address 0x4 - core index']
  #allocation1 [shape = 'u32[144,128]{1,0:T(1,128)}', space=vmem, size = 0x12000, scoped, tag = 'internal scratch']
  #allocation2 [shape = 'bf16[48,512]{1,0:T(16,128)(2,1)}', space=vmem, size = 0xc000, scoped, tag = 'scratch operand']
  #allocation3 [shape = 'bf16[16,640]{1,0:T(16,128)(2,1)}', space=vmem, size = 0x5000, scoped, tag = 'scratch operand']
  #allocation4 [shape = 'bf16[48,512]{1,0:T(16,128)(2,1)}', space=vmem, size = 0xc000, scoped, tag = 'scratch operand']
  %s0 = inlined_call_operand.vmem [shape: bf16[1,16,640], index: 0, kind: input, shape index: {}]
  %s1 = inlined_call_operand.vmem [shape: bf16[32,48], index: 1, kind: input, shape index: {}]
  %s2 = inlined_call_operand.vmem [shape: f32[32,1], index: 2, kind: input, shape index: {}]
  %s3 = inlined_call_operand.vmem [shape: bf16[16,48], index: 3, kind: input, shape index: {}]
  %s4 = inlined_call_operand.vmem [shape: f32[16,1], index: 4, kind: input, shape index: {}]
  %s5 = inlined_call_operand.vmem [shape: f32[1,512], index: 5, kind: input, shape index: {}]
  %s6 = inlined_call_operand.vmem [shape: f32[1,16,512], index: 6, kind: output, shape index: {}]
  %s7 = sld [smem:[#allocation0]]
  $region34: #{temporal_block.1} parent=0
    _
  %s9 = ssub.s32 1, %s7
  %s10 = scalar_select 0, %s9, %s7
  // Predicated region
  $region2: #{temporal_block.1} parent=0 // pred_check
    _
  $region3: #{temporal_block.1} parent=0 // pred_check_branch
    %12 = sbr.rel (0) target = $region5
  $region4: #{temporal_block.1} parent=0 // pred_region
    _
  $region5: #{temporal_block.1} parent=0 // pred_fallthru
    _
  // Predicated region
  $region6: #{temporal_block.1} parent=0 // pred_check
    _
  $region7: #{temporal_block.1} parent=0 // pred_check_branch
    %14 = sbr.rel (0) target = $region9
  $region8: #{temporal_block.1} parent=0 // pred_region
    _
  $region9: #{temporal_block.1} parent=0 // pred_fallthru
    _
  // Predicated region
  $region10: #{temporal_block.1} parent=0 // pred_check
    _
  $region11: #{temporal_block.1} parent=0 // pred_check_branch
    %16 = sbr.rel (0) target = $region13
  $region12: #{temporal_block.1} parent=0 // pred_region
    _
  $region13: #{temporal_block.1} parent=0 // pred_fallthru
    _
  // Predicated region
  $region14: #{temporal_block.1} parent=0 // pred_check
    _
  $region15: #{temporal_block.1} parent=0 // pred_check_branch
    %18 = sbr.rel (0) target = $region17
  $region16: #{temporal_block.1} parent=0 // pred_region
    _
  $region17: #{temporal_block.1} parent=0 // pred_fallthru
    _
  // Predicated region
  $region18: #{temporal_block.1} parent=0 // pred_check
    _
  $region19: #{temporal_block.1} parent=0 // pred_check_branch
    %20 = sbr.rel (0) target = $region21
  $region20: #{temporal_block.1} parent=0 // pred_region
    _
  $region21: #{temporal_block.1} parent=0 // pred_fallthru
    _
  // Predicated region
  $region22: #{temporal_block.1} parent=0 // pred_check
    _
  $region23: #{temporal_block.1} parent=0 // pred_check_branch
    %22 = sbr.rel (0) target = $region25
  $region24: #{temporal_block.1} parent=0 // pred_region
    _
  $region25: #{temporal_block.1} parent=0 // pred_fallthru
    _
  %v24 = vld [vmem:[%s0] sm:$0xff]
  %v25 = vld [vmem:[%s0 + $0x8] sm:$0xff]
  %v26 = vld [vmem:[%s0 + $0x10] sm:$0xf]
  %v27 = vld [vmem:[%s0 + $0x14] sm:$0xff]
  %v28 = vld [vmem:[%s0 + $0x1c] sm:$0xff]
  %v29 = vld [vmem:[%s0 + $0x24] sm:$0xf]
  %v36 = vunpack.c.l.b16 %v24
  %v37 = vunpack.c.h.b16 %v24
  %v38 = vunpack.c.l.b16 %v25
  %v39 = vunpack.c.h.b16 %v25
  %v40 = vunpack.c.l.b16 %v26
  %v41 = vunpack.c.l.b16 %v27
  %v42 = vunpack.c.h.b16 %v27
  %v43 = vunpack.c.l.b16 %v28
  %v44 = vunpack.c.h.b16 %v28
  %v45 = vunpack.c.l.b16 %v29
  %v46 = vpack.c.b16 %v41, %v36
  %v47 = vpack.c.b16 %v42, %v37
  %v48 = vpack.c.b16 %v43, %v38
  %v49 = vpack.c.b16 %v44, %v39
  %v50 = vpack.c.b16 %v45, %v40
  %51 = vrot.lane.b32.xlu0 %v46, 4
  %v52 = vpop.permute.xlu0 %51
  %53 = vrot.lane.b32.xlu0 %v47, 4
  %v54 = vpop.permute.xlu0 %53
  %55 = vrot.lane.b32.xlu0 %v48, 4
  %v56 = vpop.permute.xlu0 %55
  %57 = vrot.lane.b32.xlu0 %v49, 4
  %v58 = vpop.permute.xlu0 %57
  %59 = vrot.lane.b32.xlu0 %v50, 4
  %v60 = vpop.permute.xlu0 %59
  %vm61 = vcmask 31744
  %v62 = vsel %vm61, %v52, %v54
  %v63 = vsel %vm61, %v54, %v56
  %v64 = vsel %vm61, %v56, %v58
  %v65 = vsel %vm61, %v58, %v60
  %70 = vst [vmem:[#allocation2] sm:$0xff] %v62
  %71 = vst [vmem:[#allocation2 + $0x8] sm:$0xff] %v63
  %72 = vst [vmem:[#allocation2 + $0x10] sm:$0xff] %v64
  %73 = vst [vmem:[#allocation2 + $0x18] sm:$0xff] %v65
  %74 = vrot.lane.b32.xlu0 %v46, 2
  %v75 = vpop.permute.xlu0 %74
  %76 = vrot.lane.b32.xlu0 %v47, 2
  %v77 = vpop.permute.xlu0 %76
  %78 = vrot.lane.b32.xlu0 %v48, 2
  %v79 = vpop.permute.xlu0 %78
  %80 = vrot.lane.b32.xlu0 %v49, 2
  %v81 = vpop.permute.xlu0 %80
  %82 = vrot.lane.b32.xlu0 %v50, 2
  %v83 = vpop.permute.xlu0 %82
  %vm84 = vcmask 15360
  %v85 = vsel %vm84, %v75, %v77
  %v86 = vsel %vm84, %v77, %v79
  %v87 = vsel %vm84, %v79, %v81
  %v88 = vsel %vm84, %v81, %v83
  %93 = vst [vmem:[#allocation2 + $0x20] sm:$0xff] %v85
  %94 = vst [vmem:[#allocation2 + $0x28] sm:$0xff] %v86
  %95 = vst [vmem:[#allocation2 + $0x30] sm:$0xff] %v87
  %96 = vst [vmem:[#allocation2 + $0x38] sm:$0xff] %v88
  %101 = vst [vmem:[#allocation2 + $0x40] sm:$0xff] %v47
  %102 = vst [vmem:[#allocation2 + $0x48] sm:$0xff] %v48
  %103 = vst [vmem:[#allocation2 + $0x50] sm:$0xff] %v49
  %104 = vst [vmem:[#allocation2 + $0x58] sm:$0xff] %v50
  %v105 = vld [vmem:[%s1] sm:$0xf]
  %v106 = vld [vmem:[%s1 + $0x4] sm:$0xf]
  %v107 = vld [vmem:[%s1 + $0x8] sm:$0xf]
  %v108 = vld [vmem:[%s1 + $0xc] sm:$0xf]
  %v109 = vld [vmem:[#allocation2] sm:$0xff]
  %v110 = vld [vmem:[#allocation2 + $0x8] sm:$0xff]
  %v111 = vld [vmem:[#allocation2 + $0x10] sm:$0xff]
  %v112 = vld [vmem:[#allocation2 + $0x18] sm:$0xff]
  %v113 = vld [vmem:[#allocation2 + $0x20] sm:$0xff]
  %v114 = vld [vmem:[#allocation2 + $0x28] sm:$0xff]
  %v115 = vld [vmem:[#allocation2 + $0x30] sm:$0xff]
  %v116 = vld [vmem:[#allocation2 + $0x38] sm:$0xff]
  %v117 = vld [vmem:[#allocation2 + $0x40] sm:$0xff]
  %v118 = vld [vmem:[#allocation2 + $0x48] sm:$0xff]
  %v119 = vld [vmem:[#allocation2 + $0x50] sm:$0xff]
  %v120 = vld [vmem:[#allocation2 + $0x58] sm:$0xff]
  %v121 = vld [vmem:[%s2] sm:$0xff]
  %v122 = vld [vmem:[%s2 + $0x8] sm:$0xff]
  %v123 = vld [vmem:[%s2 + $0x10] sm:$0xff]
  %v124 = vld [vmem:[%s2 + $0x18] sm:$0xff]
  %126 = vset.pattern.permute.xlu0 0
  %127 = vperm.xlu0 %126, %v121
  %v128 = vpop.permute.xlu0 %127
  %131 = vset.pattern.permute.xlu0 0
  %132 = vperm.xlu0 %131, %v122
  %v133 = vpop.permute.xlu0 %132
  %136 = vset.pattern.permute.xlu0 0
  %137 = vperm.xlu0 %136, %v123
  %v138 = vpop.permute.xlu0 %137
  %141 = vset.pattern.permute.xlu0 0
  %142 = vperm.xlu0 %141, %v124
  %v143 = vpop.permute.xlu0 %142
  %v149 = vunpack.c.l.b16 %v105
  %v150 = vunpack.c.l.b16 %v106
  %v151 = vunpack.c.l.b16 %v107
  %v152 = vunpack.c.l.b16 %v108
  %v153 = vpack.c.b16 %v150, %v149
  %v154 = vpack.c.b16 %v152, %v151
  %vm155 = vcmask 392192
  %v157 = vsel %vm155, %v153, 0
  %v160 = vsel %vm155, %v154, 0
  %162 = vmatprep.subr.bf16.mxu0 %v110
  %163 = vmatpush1.bf16.msra.mxu0 %v109
  %164 = vmatprep.subr.bf16.mxu0 %v114
  %165 = vmatpush1.bf16.msra.mxu0 %v113
  %166 = vmatprep.subr.bf16.mxu0 %v118
  %167 = vmatpush1.bf16.msra.mxu0 %v117
  %168 = vmatprep.subr.bf16.mxu0 0
  %169 = vmatpush1.bf16.msra.mxu0 0
  %170 = vmatprep.subr.bf16.mxu0 0
  %171 = vmatpush1.bf16.msra.mxu0 0
  %172 = vmatprep.subr.bf16.mxu0 0
  %173 = vmatpush1.bf16.msra.mxu0 0
  %174 = vmatprep.subr.bf16.mxu0 0
  %175 = vmatpush1.bf16.msra.mxu0 0
  %176 = vmatprep.subr.bf16.mxu0 0
  %177 = vmatpush1.bf16.msra.mxu0 0
  %178 = vmatprep.subr.bf16.mxu0 0
  %179 = vmatpush1.bf16.msra.mxu0 0
  %180 = vmatprep.subr.bf16.mxu0 0
  %181 = vmatpush1.bf16.msra.mxu0 0
  %182 = vmatprep.subr.bf16.mxu0 0
  %183 = vmatpush1.bf16.msra.mxu0 0
  %184 = vmatprep.subr.bf16.mxu0 0
  %185 = vmatpush1.bf16.msra.mxu0 0
  %186 = vmatprep.subr.bf16.mxu0 0
  %187 = vmatpush1.bf16.msra.mxu0 0
  %188 = vmatprep.subr.bf16.mxu0 0
  %189 = vmatpush1.bf16.msra.mxu0 0
  %190 = vmatprep.subr.bf16.mxu0 0
  %191 = vmatpush1.bf16.msra.mxu0 0
  %192 = vmatprep.subr.bf16.mxu0 0
  %193 = vmatpush1.bf16.msra.mxu0 0
  %194 = vmatprep.mubr.bf16.mxu0 0
  %195 = vmatmul.mubr.bf16.gmra.mrb[0].mxu0 %v157
  %v196 = vpop.f32.mrb[0].mxu0
  %v197 = vadd.f32 %v128, %v196
  %v198 = vpop.f32.mrb[0].mxu0
  %v199 = vadd.f32 %v128, %v198
  %v200 = vpop.f32.mrb[0].mxu0
  %v201 = vadd.f32 %v133, %v200
  %v202 = vpop.f32.mrb[0].mxu0
  %v203 = vadd.f32 %v133, %v202
  %204 = vmatprep.mubr.bf16.mxu0 0
  %205 = vmatmul.mubr.bf16.gmra.mrb[0].mxu0 %v160
  %v206 = vpop.f32.mrb[0].mxu0
  %v207 = vadd.f32 %v138, %v206
  %v208 = vpop.f32.mrb[0].mxu0
  %v209 = vadd.f32 %v138, %v208
  %v210 = vpop.f32.mrb[0].mxu0
  %v211 = vadd.f32 %v143, %v210
  %v212 = vpop.f32.mrb[0].mxu0
  %v213 = vadd.f32 %v143, %v212
  %214 = vdwg.mxu0
  %215 = vmatprep.subr.bf16.mxu0 %v112
  %216 = vmatpush1.bf16.msra.mxu0 %v111
  %217 = vmatprep.subr.bf16.mxu0 %v116
  %218 = vmatpush1.bf16.msra.mxu0 %v115
  %219 = vmatprep.subr.bf16.mxu0 %v120
  %220 = vmatpush1.bf16.msra.mxu0 %v119
  %221 = vmatprep.subr.bf16.mxu0 0
  %222 = vmatpush1.bf16.msra.mxu0 0
  %223 = vmatprep.subr.bf16.mxu0 0
  %224 = vmatpush1.bf16.msra.mxu0 0
  %225 = vmatprep.subr.bf16.mxu0 0
  %226 = vmatpush1.bf16.msra.mxu0 0
  %227 = vmatprep.subr.bf16.mxu0 0
  %228 = vmatpush1.bf16.msra.mxu0 0
  %229 = vmatprep.subr.bf16.mxu0 0
  %230 = vmatpush1.bf16.msra.mxu0 0
  %231 = vmatprep.subr.bf16.mxu0 0
  %232 = vmatpush1.bf16.msra.mxu0 0
  %233 = vmatprep.subr.bf16.mxu0 0
  %234 = vmatpush1.bf16.msra.mxu0 0
  %235 = vmatprep.subr.bf16.mxu0 0
  %236 = vmatpush1.bf16.msra.mxu0 0
  %237 = vmatprep.subr.bf16.mxu0 0
  %238 = vmatpush1.bf16.msra.mxu0 0
  %239 = vmatprep.subr.bf16.mxu0 0
  %240 = vmatpush1.bf16.msra.mxu0 0
  %241 = vmatprep.subr.bf16.mxu0 0
  %242 = vmatpush1.bf16.msra.mxu0 0
  %243 = vmatprep.subr.bf16.mxu0 0
  %244 = vmatpush1.bf16.msra.mxu0 0
  %245 = vmatprep.subr.bf16.mxu0 0
  %246 = vmatpush1.bf16.msra.mxu0 0
  %247 = vmatprep.mubr.bf16.mxu0 0
  %248 = vmatmul.mubr.bf16.gmra.mrb[0].mxu0 %v157
  %v249 = vpop.f32.mrb[0].mxu0
  %v250 = vadd.f32 %v128, %v249
  %v251 = vpop.f32.mrb[0].mxu0
  %v252 = vadd.f32 %v128, %v251
  %v253 = vpop.f32.mrb[0].mxu0
  %v254 = vadd.f32 %v133, %v253
  %v255 = vpop.f32.mrb[0].mxu0
  %v256 = vadd.f32 %v133, %v255
  %257 = vmatprep.mubr.bf16.mxu0 0
  %258 = vmatmul.mubr.bf16.gmra.mrb[0].mxu0 %v160
  %v259 = vpop.f32.mrb[0].mxu0
  %v260 = vadd.f32 %v138, %v259
  %v261 = vpop.f32.mrb[0].mxu0
  %v262 = vadd.f32 %v138, %v261
  %v263 = vpop.f32.mrb[0].mxu0
  %v264 = vadd.f32 %v143, %v263
  %v265 = vpop.f32.mrb[0].mxu0
  %v266 = vadd.f32 %v143, %v265
  %267 = vdwg.mxu0
  %v268 = vmax.f32 %v197, 0.0
  %v269 = vmax.f32 %v199, 0.0
  %v270 = vmax.f32 %v250, 0.0
  %v271 = vmax.f32 %v252, 0.0
  %v272 = vmax.f32 %v201, 0.0
  %v273 = vmax.f32 %v203, 0.0
  %v274 = vmax.f32 %v254, 0.0
  %v275 = vmax.f32 %v256, 0.0
  %276 = vst [vmem:[#allocation3] sm:$0xff] 0
  %v277 = vld [vmem:[%s5] sm:$0xf]
  %v279 = vlaneseq
  %v280 = vshrl.u32 %v279, 7
  %v281 = vsub.s32 0, %v280
  %v282 = vrot.slane %v277, %v281
  %v283 = vlaneseq
  %v284 = vshrl.u32 %v283, 7
  %v285 = vsub.s32 1, %v284
  %v286 = vrot.slane %v277, %v285
  %v287 = vlaneseq
  %v288 = vshrl.u32 %v287, 7
  %v289 = vsub.s32 2, %v288
  %v290 = vrot.slane %v277, %v289
  %v291 = vlaneseq
  %v292 = vshrl.u32 %v291, 7
  %v293 = vsub.s32 3, %v292
  %v294 = vrot.slane %v277, %v293
  %v299 = vmul.f32 %v268, %v282
  %v300 = vmul.f32 %v269, %v286
  %v301 = vmul.f32 %v270, %v290
  %v302 = vmul.f32 %v271, %v294
  %v303 = vmul.f32 %v272, %v282
  %v304 = vmul.f32 %v273, %v286
  %v305 = vmul.f32 %v274, %v290
  %v306 = vmul.f32 %v275, %v294
  %v307 = vpack.c.bf16 %v303, %v299
  %v308 = vpack.c.bf16 %v304, %v300
  %v309 = vpack.c.bf16 %v305, %v301
  %v310 = vpack.c.bf16 %v306, %v302
  %311 = vst [vmem:[#allocation3 + $0x8] sm:$0xff] %v307
  %312 = vst [vmem:[#allocation3 + $0x10] sm:$0xff] %v308
  %313 = vst [vmem:[#allocation3 + $0x18] sm:$0xff] %v309
  %314 = vst [vmem:[#allocation3 + $0x20] sm:$0xff] %v310
  %v315 = vld [vmem:[#allocation3] sm:$0xff]
  %v316 = vld [vmem:[#allocation3 + $0x8] sm:$0xff]
  %v317 = vld [vmem:[#allocation3 + $0x10] sm:$0xff]
  %v318 = vld [vmem:[#allocation3 + $0x18] sm:$0xff]
  %v319 = vld [vmem:[#allocation3 + $0x20] sm:$0xff]
  %325 = vrot.lane.b32.xlu0 %v315, 4
  %v326 = vpop.permute.xlu0 %325
  %327 = vrot.lane.b32.xlu0 %v316, 4
  %v328 = vpop.permute.xlu0 %327
  %329 = vrot.lane.b32.xlu0 %v317, 4
  %v330 = vpop.permute.xlu0 %329
  %331 = vrot.lane.b32.xlu0 %v318, 4
  %v332 = vpop.permute.xlu0 %331
  %333 = vrot.lane.b32.xlu0 %v319, 4
  %v334 = vpop.permute.xlu0 %333
  %v335 = vsel %vm61, %v326, %v328
  %v336 = vsel %vm61, %v328, %v330
  %v337 = vsel %vm61, %v330, %v332
  %v338 = vsel %vm61, %v332, %v334
  %343 = vst [vmem:[#allocation4] sm:$0xff] %v335
  %344 = vst [vmem:[#allocation4 + $0x8] sm:$0xff] %v336
  %345 = vst [vmem:[#allocation4 + $0x10] sm:$0xff] %v337
  %346 = vst [vmem:[#allocation4 + $0x18] sm:$0xff] %v338
  %v347 = vld [vmem:[#allocation3] sm:$0xff]
  %v348 = vld [vmem:[#allocation3 + $0x8] sm:$0xff]
  %v349 = vld [vmem:[#allocation3 + $0x10] sm:$0xff]
  %v350 = vld [vmem:[#allocation3 + $0x18] sm:$0xff]
  %v351 = vld [vmem:[#allocation3 + $0x20] sm:$0xff]
  %357 = vrot.lane.b32.xlu0 %v347, 2
  %v358 = vpop.permute.xlu0 %357
  %359 = vrot.lane.b32.xlu0 %v348, 2
  %v360 = vpop.permute.xlu0 %359
  %361 = vrot.lane.b32.xlu0 %v349, 2
  %v362 = vpop.permute.xlu0 %361
  %363 = vrot.lane.b32.xlu0 %v350, 2
  %v364 = vpop.permute.xlu0 %363
  %365 = vrot.lane.b32.xlu0 %v351, 2
  %v366 = vpop.permute.xlu0 %365
  %v367 = vsel %vm84, %v358, %v360
  %v368 = vsel %vm84, %v360, %v362
  %v369 = vsel %vm84, %v362, %v364
  %v370 = vsel %vm84, %v364, %v366
  %375 = vst [vmem:[#allocation4 + $0x20] sm:$0xff] %v367
  %376 = vst [vmem:[#allocation4 + $0x28] sm:$0xff] %v368
  %377 = vst [vmem:[#allocation4 + $0x30] sm:$0xff] %v369
  %378 = vst [vmem:[#allocation4 + $0x38] sm:$0xff] %v370
  %v379 = vld [vmem:[#allocation3 + $0x8] sm:$0xff]
  %v380 = vld [vmem:[#allocation3 + $0x10] sm:$0xff]
  %v381 = vld [vmem:[#allocation3 + $0x18] sm:$0xff]
  %v382 = vld [vmem:[#allocation3 + $0x20] sm:$0xff]
  %383 = vst [vmem:[#allocation4 + $0x40] sm:$0xff] %v379
  %384 = vst [vmem:[#allocation4 + $0x48] sm:$0xff] %v380
  %385 = vst [vmem:[#allocation4 + $0x50] sm:$0xff] %v381
  %386 = vst [vmem:[#allocation4 + $0x58] sm:$0xff] %v382
  %v387 = vld [vmem:[%s3] sm:$0xf]
  %v388 = vld [vmem:[%s3 + $0x4] sm:$0xf]
  %v389 = vld [vmem:[#allocation4] sm:$0xff]
  %v390 = vld [vmem:[#allocation4 + $0x8] sm:$0xff]
  %v391 = vld [vmem:[#allocation4 + $0x10] sm:$0xff]
  %v392 = vld [vmem:[#allocation4 + $0x18] sm:$0xff]
  %v393 = vld [vmem:[#allocation4 + $0x20] sm:$0xff]
  %v394 = vld [vmem:[#allocation4 + $0x28] sm:$0xff]
  %v395 = vld [vmem:[#allocation4 + $0x30] sm:$0xff]
  %v396 = vld [vmem:[#allocation4 + $0x38] sm:$0xff]
  %v397 = vld [vmem:[#allocation4 + $0x40] sm:$0xff]
  %v398 = vld [vmem:[#allocation4 + $0x48] sm:$0xff]
  %v399 = vld [vmem:[#allocation4 + $0x50] sm:$0xff]
  %v400 = vld [vmem:[#allocation4 + $0x58] sm:$0xff]
  %v401 = vld [vmem:[%s4] sm:$0xff]
  %v402 = vld [vmem:[%s4 + $0x8] sm:$0xff]
  %404 = vset.pattern.permute.xlu0 0
  %405 = vperm.xlu0 %404, %v401
  %v406 = vpop.permute.xlu0 %405
  %409 = vset.pattern.permute.xlu0 0
  %410 = vperm.xlu0 %409, %v402
  %v411 = vpop.permute.xlu0 %410
  %v415 = vunpack.c.l.b16 %v387
  %v416 = vunpack.c.l.b16 %v388
  %v417 = vpack.c.b16 %v416, %v415
  %v419 = vsel %vm155, %v417, 0
  %421 = vmatprep.subr.bf16.mxu0 %v390
  %422 = vmatpush1.bf16.msra.mxu0 %v389
  %423 = vmatprep.subr.bf16.mxu0 %v394
  %424 = vmatpush1.bf16.msra.mxu0 %v393
  %425 = vmatprep.subr.bf16.mxu0 %v398
  %426 = vmatpush1.bf16.msra.mxu0 %v397
  %427 = vmatprep.subr.bf16.mxu0 0
  %428 = vmatpush1.bf16.msra.mxu0 0
  %429 = vmatprep.subr.bf16.mxu0 0
  %430 = vmatpush1.bf16.msra.mxu0 0
  %431 = vmatprep.subr.bf16.mxu0 0
  %432 = vmatpush1.bf16.msra.mxu0 0
  %433 = vmatprep.subr.bf16.mxu0 0
  %434 = vmatpush1.bf16.msra.mxu0 0
  %435 = vmatprep.subr.bf16.mxu0 0
  %436 = vmatpush1.bf16.msra.mxu0 0
  %437 = vmatprep.subr.bf16.mxu0 0
  %438 = vmatpush1.bf16.msra.mxu0 0
  %439 = vmatprep.subr.bf16.mxu0 0
  %440 = vmatpush1.bf16.msra.mxu0 0
  %441 = vmatprep.subr.bf16.mxu0 0
  %442 = vmatpush1.bf16.msra.mxu0 0
  %443 = vmatprep.subr.bf16.mxu0 0
  %444 = vmatpush1.bf16.msra.mxu0 0
  %445 = vmatprep.subr.bf16.mxu0 0
  %446 = vmatpush1.bf16.msra.mxu0 0
  %447 = vmatprep.subr.bf16.mxu0 0
  %448 = vmatpush1.bf16.msra.mxu0 0
  %449 = vmatprep.subr.bf16.mxu0 0
  %450 = vmatpush1.bf16.msra.mxu0 0
  %451 = vmatprep.subr.bf16.mxu0 0
  %452 = vmatpush1.bf16.msra.mxu0 0
  %453 = vmatprep.mubr.bf16.mxu0 0
  %454 = vmatmul.mubr.bf16.gmra.mrb[0].mxu0 %v419
  %v455 = vpop.f32.mrb[0].mxu0
  %v456 = vadd.f32 %v406, %v455
  %v457 = vpop.f32.mrb[0].mxu0
  %v458 = vadd.f32 %v406, %v457
  %v459 = vpop.f32.mrb[0].mxu0
  %v460 = vadd.f32 %v411, %v459
  %v461 = vpop.f32.mrb[0].mxu0
  %v462 = vadd.f32 %v411, %v461
  %463 = vdwg.mxu0
  %464 = vmatprep.subr.bf16.mxu0 %v392
  %465 = vmatpush1.bf16.msra.mxu0 %v391
  %466 = vmatprep.subr.bf16.mxu0 %v396
  %467 = vmatpush1.bf16.msra.mxu0 %v395
  %468 = vmatprep.subr.bf16.mxu0 %v400
  %469 = vmatpush1.bf16.msra.mxu0 %v399
  %470 = vmatprep.subr.bf16.mxu0 0
  %471 = vmatpush1.bf16.msra.mxu0 0
  %472 = vmatprep.subr.bf16.mxu0 0
  %473 = vmatpush1.bf16.msra.mxu0 0
  %474 = vmatprep.subr.bf16.mxu0 0
  %475 = vmatpush1.bf16.msra.mxu0 0
  %476 = vmatprep.subr.bf16.mxu0 0
  %477 = vmatpush1.bf16.msra.mxu0 0
  %478 = vmatprep.subr.bf16.mxu0 0
  %479 = vmatpush1.bf16.msra.mxu0 0
  %480 = vmatprep.subr.bf16.mxu0 0
  %481 = vmatpush1.bf16.msra.mxu0 0
  %482 = vmatprep.subr.bf16.mxu0 0
  %483 = vmatpush1.bf16.msra.mxu0 0
  %484 = vmatprep.subr.bf16.mxu0 0
  %485 = vmatpush1.bf16.msra.mxu0 0
  %486 = vmatprep.subr.bf16.mxu0 0
  %487 = vmatpush1.bf16.msra.mxu0 0
  %488 = vmatprep.subr.bf16.mxu0 0
  %489 = vmatpush1.bf16.msra.mxu0 0
  %490 = vmatprep.subr.bf16.mxu0 0
  %491 = vmatpush1.bf16.msra.mxu0 0
  %492 = vmatprep.subr.bf16.mxu0 0
  %493 = vmatpush1.bf16.msra.mxu0 0
  %494 = vmatprep.subr.bf16.mxu0 0
  %495 = vmatpush1.bf16.msra.mxu0 0
  %496 = vmatprep.mubr.bf16.mxu0 0
  %497 = vmatmul.mubr.bf16.gmra.mrb[0].mxu0 %v419
  %v498 = vpop.f32.mrb[0].mxu0
  %v499 = vadd.f32 %v406, %v498
  %v500 = vpop.f32.mrb[0].mxu0
  %v501 = vadd.f32 %v406, %v500
  %v502 = vpop.f32.mrb[0].mxu0
  %v503 = vadd.f32 %v411, %v502
  %v504 = vpop.f32.mrb[0].mxu0
  %v505 = vadd.f32 %v411, %v504
  %506 = vdwg.mxu0
  %v507 = vmax.f32 %v456, 0.0
  %v508 = vmax.f32 %v458, 0.0
  %v509 = vmax.f32 %v499, 0.0
  %v510 = vmax.f32 %v501, 0.0
  %v511 = vmax.f32 %v460, 0.0
  %v512 = vmax.f32 %v462, 0.0
  %v513 = vmax.f32 %v503, 0.0
  %v514 = vmax.f32 %v505, 0.0
  %v515 = vadd.f32 %v507, %v207
  %v516 = vadd.f32 %v508, %v209
  %v517 = vadd.f32 %v509, %v260
  %v518 = vadd.f32 %v510, %v262
  %v519 = vadd.f32 %v511, %v211
  %v520 = vadd.f32 %v512, %v213
  %v521 = vadd.f32 %v513, %v264
  %v522 = vadd.f32 %v514, %v266
  %v523 = vmax.f32 %v515, 0.0
  %v524 = vmax.f32 %v516, 0.0
  %v525 = vmax.f32 %v517, 0.0
  %v526 = vmax.f32 %v518, 0.0
  %v527 = vmax.f32 %v519, 0.0
  %v528 = vmax.f32 %v520, 0.0
  %v529 = vmax.f32 %v521, 0.0
  %v530 = vmax.f32 %v522, 0.0
  %531 = vst [vmem:[%s6] sm:$0xff] %v523
  %532 = vst [vmem:[%s6 + $0x8] sm:$0xff] %v524
  %533 = vst [vmem:[%s6 + $0x10] sm:$0xff] %v525
  %534 = vst [vmem:[%s6 + $0x18] sm:$0xff] %v526
  %535 = vst [vmem:[%s6 + $0x20] sm:$0xff] %v527
  %536 = vst [vmem:[%s6 + $0x28] sm:$0xff] %v528
  %537 = vst [vmem:[%s6 + $0x30] sm:$0xff] %v529
  %538 = vst [vmem:[%s6 + $0x38] sm:$0xff] %v530
  // Predicated region
  $region26: #{temporal_block.1} parent=0 // pred_check
    _
  $region27: #{temporal_block.1} parent=0 // pred_check_branch
    %540 = sbr.rel (0) target = $region29
  $region28: #{temporal_block.1} parent=0 // pred_region
    _
  $region29: #{temporal_block.1} parent=0 // pred_fallthru
    _
  // Predicated region
  $region30: #{temporal_block.1} parent=0 // pred_check
    _
  $region31: #{temporal_block.1} parent=0 // pred_check_branch
    %542 = sbr.rel (0) target = $region33
  $region32: #{temporal_block.1} parent=0 // pred_region
    _
  $region33: #{temporal_block.1} parent=0 // pred_fallthru
    _

</llo_original>
